<compile_context>
chip_gen: v5e
topology: v5e:2x2
jax: 0.10.0
libtpu: 0.0.40
codegen_flags: <defaults>
</compile_context>

<pallas_src>
import jax
import jax.numpy as jnp
from jax.experimental import pallas as pl
from jax.experimental.pallas import tpu as pltpu


_LANE = 512           # lane-dense last dim (multiple of 128)
_MAX_TILE_ROWS = 512  # 512 x 512 x f32 = 1 MiB per tile buffer


def _vdrop_kernel(log_alpha_ref, x_ref, noise_ref, o_ref):
    # clamp(log_alpha, max=0.0); sqrt(exp(la)) == exp(0.5 * la) -> one EUP op.
    la = jnp.minimum(log_alpha_ref[0], 0.0)
    scale = jnp.exp(0.5 * la)
    # out = x * (1 + e * sqrt(alpha))  -- elementwise hot path on the VPU.
    o_ref[...] = x_ref[...] * (1.0 + noise_ref[...] * scale)


def variational_dropout(x, log_alpha, key):
    """Forward pass of VariationalDropout (training mode).

    x:         float32 activations of any shape (e.g. NCHW).
    log_alpha: scalar parameter (clamped to <= 0 inside the kernel).
    key:       jax PRNG key used to draw the Gaussian noise.
    """
    orig_shape = x.shape
    orig_dtype = x.dtype
    total = x.size

    # ---- flatten to a lane-dense 2-D slab and pick the tiling -----------------
    rows_needed = pl.cdiv(total, _LANE)
    if rows_needed <= _MAX_TILE_ROWS:
        tile_rows, grid_rows = rows_needed, 1          # single block == full array
    else:
        tile_rows = _MAX_TILE_ROWS                     # multiple of 8
        grid_rows = pl.cdiv(rows_needed, tile_rows)
    rows = grid_rows * tile_rows
    padded_total = rows * _LANE

    flat = x.reshape(-1).astype(jnp.float32)
    if padded_total != total:
        flat = jnp.pad(flat, (0, padded_total - total))
    x2d = flat.reshape(rows, _LANE)

    # e ~ N(0, 1), drawn at the padded slab shape (padding lanes are discarded).
    noise2d = jax.random.normal(key, (rows, _LANE), dtype=jnp.float32)

    log_alpha_arr = jnp.asarray([log_alpha], dtype=jnp.float32)

    out2d = pl.pallas_call(
        _vdrop_kernel,
        out_shape=jax.ShapeDtypeStruct((rows, _LANE), jnp.float32),
        grid=(grid_rows,),
        in_specs=[
            pl.BlockSpec(memory_space=pltpu.MemorySpace.SMEM),       # log_alpha
            pl.BlockSpec((tile_rows, _LANE), lambda i: (i, 0)),      # x tile
            pl.BlockSpec((tile_rows, _LANE), lambda i: (i, 0)),      # noise tile
        ],
        out_specs=pl.BlockSpec((tile_rows, _LANE), lambda i: (i, 0)),
        compiler_params=pltpu.CompilerParams(
            dimension_semantics=("parallel",)),   # shard row tiles across TCs (v7x)
    )(log_alpha_arr, x2d, noise2d)

    out = out2d.reshape(-1)[:total].reshape(orig_shape)
    return out.astype(orig_dtype)


if __name__ == "__main__":
    # Deterministic parameter init (matches nn.Parameter(torch.Tensor([-3.0]))).
    log_alpha = jnp.float32(-3.0)

    key = jax.random.PRNGKey(0)
    x_key, noise_key = jax.random.split(key)
    x = jax.random.normal(x_key, (2, 4, 16, 16), dtype=jnp.float32)

    out = variational_dropout(x, log_alpha, noise_key)
    jax.block_until_ready(out)

    # Reference: reproduce the exact noise stream the wrapper draws.
    # total = 2048 -> (4, 512) slab, no padding at this toy size.
    noise = jax.random.normal(noise_key, (4, _LANE), dtype=jnp.float32).reshape(x.shape)
    expected = x * (1.0 + noise * jnp.exp(0.5 * jnp.minimum(log_alpha, 0.0)))

    assert out.shape == x.shape and out.dtype == x.dtype
    assert bool(jnp.all(jnp.isfinite(out)))
    assert bool(jnp.allclose(out, expected, rtol=1e-5, atol=1e-5))

    print("KERNEL_OK")
</pallas_src>

<mosaic_0001>
module attributes {stable_mosaic.version = 11 : i64} {
  func.func @_vdrop_kernel(%arg0: i32, %arg1: memref<1xf32, #tpu.memory_space<smem>>, %arg2: memref<4x512xf32, #tpu.memory_space<vmem>>, %arg3: memref<4x512xf32, #tpu.memory_space<vmem>>, %arg4: memref<4x512xf32, #tpu.memory_space<vmem>>) attributes {dimension_semantics = [#tpu.dimension_semantics<parallel>], iteration_bounds = array<i64: 1>, scalar_prefetch = 0 : i64, scratch_operands = 0 : i64, tpu.core_type = #tpu.core_type<tc>, window_params = [{transform_indices = @transform_0, window_bounds = array<i64: 1>}, {transform_indices = @transform_1, window_bounds = array<i64: 4, 512>}, {transform_indices = @transform_2, window_bounds = array<i64: 4, 512>}, {transform_indices = @transform_3, window_bounds = array<i64: 4, 512>}]} {
    %c0 = arith.constant 0 : index
    %0 = memref.load %arg1[%c0] : memref<1xf32, #tpu.memory_space<smem>>
    %cst = arith.constant 0.000000e+00 : f32
    %1 = arith.minimumf %0, %cst : f32
    %cst_0 = arith.constant 5.000000e-01 : f32
    %2 = arith.mulf %cst_0, %1 : f32
    %3 = math.exp %2 : f32
    %c0_1 = arith.constant 0 : index
    %c0_2 = arith.constant 0 : index
    %4 = vector.load %arg2[%c0_1, %c0_2] : memref<4x512xf32, #tpu.memory_space<vmem>>, vector<4x512xf32>
    %c0_3 = arith.constant 0 : index
    %c0_4 = arith.constant 0 : index
    %5 = vector.load %arg3[%c0_3, %c0_4] : memref<4x512xf32, #tpu.memory_space<vmem>>, vector<4x512xf32>
    %6 = vector.broadcast %3 : f32 to vector<4x512xf32>
    %7 = arith.mulf %5, %6 : vector<4x512xf32>
    %cst_5 = arith.constant 1.000000e+00 : f32
    %8 = vector.broadcast %cst_5 : f32 to vector<4x512xf32>
    %9 = arith.addf %8, %7 : vector<4x512xf32>
    %10 = arith.mulf %4, %9 : vector<4x512xf32>
    %c0_6 = arith.constant 0 : index
    %c0_7 = arith.constant 0 : index
    %11 = vector.load %arg4[%c0_6, %c0_7] : memref<4x512xf32, #tpu.memory_space<vmem>>, vector<4x512xf32>
    tpu.vector_store %arg4[%c0_6, %c0_7], %10 {strides = array<i32>} : memref<4x512xf32, #tpu.memory_space<vmem>>, vector<4x512xf32>,
    return
  }
  func.func @transform_0(%arg0: i32) -> i32 {
    %c0_i32 = arith.constant 0 : i32
    %c0_i32_0 = arith.constant 0 : i32
    return %c0_i32 : i32
  }
  func.func @transform_1(%arg0: i32) -> (i32, i32) {
    %c0_i32 = arith.constant 0 : i32
    %c0_i32_0 = arith.constant 0 : i32
    return %arg0, %c0_i32 : i32, i32
  }
  func.func @transform_2(%arg0: i32) -> (i32, i32) {
    %c0_i32 = arith.constant 0 : i32
    %c0_i32_0 = arith.constant 0 : i32
    return %arg0, %c0_i32 : i32, i32
  }
  func.func @transform_3(%arg0: i32) -> (i32, i32) {
    %c0_i32 = arith.constant 0 : i32
    %c0_i32_0 = arith.constant 0 : i32
    return %arg0, %c0_i32 : i32, i32
  }
}

</mosaic_0001>

<llo_original>
// kernel: tpu_custom_call.1
$region0: #{tpu_custom_call.1}
  #allocation0 [shape = 'u32[]', space=smem, size = 0x4, offset = 0x4, fixed_abs, tag = 'smem constant byte address 0x4 - core index']
  #allocation1 [shape = 'u32[72,128]{1,0:T(1,128)}', space=vmem, size = 0x9000, scoped, tag = 'internal scratch']
  #allocation2 [shape = 'f32[1]{0:T(128)S(6)}', space=smem, size = 0x200, scoped, tag = 'scoped memory for tpu_custom_call.1']
  %s0 = inlined_call_operand.<no memory space> [shape: f32[1], index: 0, kind: input, shape index: {}]
  %s1 = inlined_call_operand.hbm [shape: f32[4,512], index: 1, kind: input, shape index: {}]
  %s2 = inlined_call_operand.hbm [shape: f32[4,512], index: 2, kind: input, shape index: {}]
  %s3 = inlined_call_operand.hbm [shape: f32[4,512], index: 3, kind: output, shape index: {}]
  %s4 = sld [smem:[#allocation0]]
  $region30: #{tpu_custom_call.1} parent=0
    _
  %s6 = ssub.s32 1, %s4
  %s7 = scalar_select 0, %s6, %s4
  %8 = sst [smem:[#allocation2]] %s0
  $region1: #{tpu_custom_call.1} parent=0
    #allocation3 [shape = 'u8[8192]{0}', space=vmem, size = 0x2000, scoped, tag = 'input window, operand 1, single buffered']
    #allocation4 [shape = 's32[1]{0}', space=sflag, size = 0x4, scoped, tag = 'scoped memory for tpu_custom_call.1']
    #allocation5 [shape = 's32[1]{0}', space=sflag, size = 0x4, scoped, tag = 'scoped memory for tpu_custom_call.1']
    #allocation6 [shape = 'u8[8192]{0}', space=vmem, size = 0x2000, scoped, tag = 'input window, operand 2, single buffered']
    #allocation7 [shape = 's32[1]{0}', space=sflag, size = 0x4, scoped, tag = 'scoped memory for tpu_custom_call.1']
    #allocation8 [shape = 'u8[8192]{0}', space=vmem, size = 0x2000, scoped, tag = 'output window, operand 0, single buffered']
    %9 = vsyncpa [#allocation4], 0
    %10 = vsyncpa [#allocation7], 0
    %11 = vsyncpa [#allocation5], 0
    // Predicated region
    $region2: #{tpu_custom_call.1} parent=1 // pred_check
      _
    $region3: #{tpu_custom_call.1} parent=1 // pred_check_branch
      %13 = sbr.rel (0) target = $region5
    $region4: #{tpu_custom_call.1} parent=1 // pred_region
      _
    $region5: #{tpu_custom_call.1} parent=1 // pred_fallthru
      _
    // Predicated region
    $region6: #{tpu_custom_call.1} parent=1 // pred_check
      _
    $region7: #{tpu_custom_call.1} parent=1 // pred_check_branch
      %15 = sbr.rel (0) target = $region9
    $region8: #{tpu_custom_call.1} parent=1 // pred_region
      %17 = vsyncadd [#allocation4], 0
      %s19 = sshll.u32 %s1, 4
      %s20 = int_to_ptr.hbm [resolvable:$true] %s19
      %s21 = sshll.u32 [#allocation3], 4
      %s22 = int_to_ptr.vmem [resolvable:$true] %s21
      %24 = dma.hbm_to_vmem [thread:$0]  %s20, 256, %s22, [#allocation4]
    $region9: #{tpu_custom_call.1} parent=1 // pred_fallthru
      _
    // Predicated region
    $region10: #{tpu_custom_call.1} parent=1 // pred_check
      _
    $region11: #{tpu_custom_call.1} parent=1 // pred_check_branch
      %26 = sbr.rel (0) target = $region13
    $region12: #{tpu_custom_call.1} parent=1 // pred_region
      %28 = vsyncadd [#allocation7], 0
      %s30 = sshll.u32 %s2, 4
      %s31 = int_to_ptr.hbm [resolvable:$true] %s30
      %s32 = sshll.u32 [#allocation6], 4
      %s33 = int_to_ptr.vmem [resolvable:$true] %s32
      %35 = dma.hbm_to_vmem [thread:$0]  %s31, 256, %s33, [#allocation7]
    $region13: #{tpu_custom_call.1} parent=1 // pred_fallthru
      _
    // Predicated region
    $region14: #{tpu_custom_call.1} parent=1 // pred_check
      _
    $region15: #{tpu_custom_call.1} parent=1 // pred_check_branch
      %37 = sbr.rel (0) target = $region17
    $region16: #{tpu_custom_call.1} parent=1 // pred_region
      %39 = dma.done [#allocation4], 256
    $region17: #{tpu_custom_call.1} parent=1 // pred_fallthru
      _
    // Predicated region
    $region18: #{tpu_custom_call.1} parent=1 // pred_check
      _
    $region19: #{tpu_custom_call.1} parent=1 // pred_check_branch
      %41 = sbr.rel (0) target = $region21
    $region20: #{tpu_custom_call.1} parent=1 // pred_region
      %43 = dma.done [#allocation7], 256
    $region21: #{tpu_custom_call.1} parent=1 // pred_fallthru
      _
    %s44 = sld [smem:[#allocation2]]
    %s45 = smin.f32 %s44, 0.0
    %s46 = smul.f32 %s45, 0.5
    %v47 = vstv %s46
    %v48 = vmul.f32 %v47, 1.442695
    %v49 = vpow.pop %v48
    %s50 = vtos %v49
    %v51 = vld [vmem:[#allocation3] sm:$0xff]
    %v52 = vld [vmem:[#allocation3 + $0x8] sm:$0xff]
    %v53 = vld [vmem:[#allocation6] sm:$0xff]
    %v54 = vld [vmem:[#allocation6 + $0x8] sm:$0xff]
    %v55 = vstv %s50
    %v56 = vmul.f32 %v53, %v55
    %v57 = vmul.f32 %v54, %v55
    %v58 = vadd.f32 %v56, 1.0
    %v59 = vadd.f32 %v57, 1.0
    %v60 = vmul.f32 %v51, %v58
    %v61 = vmul.f32 %v52, %v59
    %62 = vst [vmem:[#allocation8] sm:$0xff] %v60
    %63 = vst [vmem:[#allocation8 + $0x8] sm:$0xff] %v61
    // Predicated region
    $region22: #{tpu_custom_call.1} parent=1 // pred_check
      _
    $region23: #{tpu_custom_call.1} parent=1 // pred_check_branch
      %65 = sbr.rel (0) target = $region25
    $region24: #{tpu_custom_call.1} parent=1 // pred_region
      %67 = vsyncadd [#allocation5], 0
      %s69 = sshll.u32 [#allocation8], 4
      %s70 = int_to_ptr.vmem [resolvable:$true] %s69
      %s71 = sshll.u32 %s3, 4
      %s72 = int_to_ptr.hbm [resolvable:$true] %s71
      %74 = dma.vmem_to_hbm [thread:$0]  %s70, 256, %s72, [#allocation5]
    $region25: #{tpu_custom_call.1} parent=1 // pred_fallthru
      _
    // Predicated region
    $region26: #{tpu_custom_call.1} parent=1 // pred_check
      _
    $region27: #{tpu_custom_call.1} parent=1 // pred_check_branch
      %76 = sbr.rel (0) target = $region29
    $region28: #{tpu_custom_call.1} parent=1 // pred_region
      %78 = dma.done [#allocation5], 256
    $region29: #{tpu_custom_call.1} parent=1 // pred_fallthru
      _
    %79 = vsyncpa [#allocation4], 1
    %80 = vsyncpa [#allocation7], 1
    %81 = vsyncpa [#allocation5], 1

</llo_original>
